<compile_context>
chip_gen: v7x
topology: tpu7x:2x2x1
jax: 0.10.0
libtpu: 0.0.40
codegen_flags: <defaults>
</compile_context>

<pallas_src>
import functools

import numpy as np
import jax
import jax.numpy as jnp
from jax.experimental import pallas as pl
from jax.experimental.pallas import tpu as pltpu


def _round_up(x, m):
    return ((x + m - 1) // m) * m


def estimator_kernel(x_ref, w0_ref, b0_ref, wh_ref, bh_ref, out_ref, *,
                     n_rest, act_dtype):
    """x_ref: (TB, Dp); w0_ref: (Dp, Ph); b0_ref: (1, Ph);
    wh_ref: (Lh, Ph, Ph); bh_ref: (Lh, 1, Ph); out_ref: (TB, Ph).

    BatchNorm is pre-folded into layer 0, so the kernel is a pure padded MLP:
    MXU matmuls with f32 accumulation, biases as broadcast adds, tanh taken in
    act_dtype (bf16 EUP on v6e/v7x).  Padded lanes stay exactly 0 throughout.
    """
    # Layer 0 (BN folded): (TB, Dp) @ (Dp, Ph).
    h = jnp.dot(x_ref[...], w0_ref[...], preferred_element_type=jnp.float32)
    h = h + b0_ref[...]
    h = jnp.tanh(h.astype(act_dtype))          # tanh(0)=0 on padded lanes
    # Hidden + output layers, statically unrolled.
    for i in range(n_rest):
        h = jnp.dot(h, wh_ref[i], preferred_element_type=jnp.float32) + bh_ref[i]
        if i < n_rest - 1:                     # Tanh after all but the last Linear
            h = jnp.tanh(h.astype(act_dtype))
    out_ref[...] = h.astype(out_ref.dtype)


def pack_estimator_params(bn_params, linears, *, param_dtype=jnp.bfloat16):
    """Fold eval-mode BatchNorm1d into the first Linear, pad + stack weights.

    Call ONCE outside the inference loop; the returned (packed, meta) is what
    estimator_forward consumes on every call.

    bn_params = (gamma, beta, running_mean, running_var, eps)
    linears   = [(W[din, dout], b[dout]), ...]   (>= 2 layers)
    """
    gamma, beta, mean, var, eps = bn_params
    scale = gamma / jnp.sqrt(var + eps)
    shift = beta - mean * scale

    w0_raw, b0_raw = linears[0]
    w0 = scale[:, None] * w0_raw               # fold BN scale into W0
    b0 = shift @ w0_raw + b0_raw               # fold BN shift into b0
    rest = list(linears[1:])
    assert len(rest) >= 1, "EstimatorNetwork has at least one hidden + final Linear"

    D = int(w0.shape[0])
    num_actions = int(rest[-1][0].shape[1])
    Dp = _round_up(D, 128)                                          # input width pad
    Ph = _round_up(max(int(w.shape[1]) for (w, _) in linears), 128)  # hidden/out width pad

    # Zero-init guarantees W0[D:, :] == 0 and all padded lanes/rows stay zero.
    W0 = jnp.zeros((Dp, Ph), param_dtype).at[:D, :w0.shape[1]].set(w0.astype(param_dtype))
    B0 = jnp.zeros((1, Ph), param_dtype).at[0, :b0.shape[0]].set(b0.astype(param_dtype))

    Lh = len(rest)
    Wh = jnp.zeros((Lh, Ph, Ph), param_dtype)
    Bh = jnp.zeros((Lh, 1, Ph), param_dtype)
    for i, (w, b) in enumerate(rest):
        Wh = Wh.at[i, : w.shape[0], : w.shape[1]].set(w.astype(param_dtype))
        Bh = Bh.at[i, 0, : b.shape[0]].set(b.astype(param_dtype))

    meta = dict(D=D, Dp=Dp, Ph=Ph, Lh=Lh, num_actions=num_actions,
                param_dtype=jnp.dtype(param_dtype))
    return (W0, B0, Wh, Bh), meta


def estimator_forward(x, packed, meta, *, block_batch=1024):
    """Forward pass of EstimatorNetwork using pre-packed parameters."""
    W0, B0, Wh, Bh = packed
    D, Dp, Ph, Lh = meta["D"], meta["Dp"], meta["Ph"], meta["Lh"]
    num_actions = meta["num_actions"]
    param_dtype = meta["param_dtype"]
    itemsize = param_dtype.itemsize

    B = x.shape[0]
    x2 = x.reshape(B, -1).astype(param_dtype)          # Flatten (glue)

    # Batch tile: rounded to the packed-sublane multiple of the param dtype
    # (8 for f32, 16 for bf16, 32 for 8-bit), >=2 grid steps when possible so
    # v7x's two TensorCores both get a share of the "parallel" batch axis.
    sub = max(8, 32 // itemsize)
    B8 = _round_up(max(B, 1), sub)
    TB = _round_up(min(block_batch, B8), sub)
    if B8 >= 2 * sub and TB >= B8:
        TB = _round_up(pl.cdiv(B8, 2), sub)
    Bp = _round_up(B8, TB)

    # Cheap input repack: jnp.pad (skipped when no padding is needed).
    pad_rows, pad_cols = Bp - B, Dp - D
    xp = jnp.pad(x2, ((0, pad_rows), (0, pad_cols))) if (pad_rows or pad_cols) else x2

    grid = (Bp // TB,)

    # Explicit VMEM budget: double-buffered batch tiles + single-buffered
    # (grid-invariant) weights/biases + live f32 activation slack.
    vmem_bytes = (2 * TB * Dp * itemsize
                  + 2 * TB * Ph * 4
                  + Dp * Ph * itemsize
                  + Lh * Ph * Ph * itemsize
                  + (1 + Lh) * Ph * itemsize
                  + 2 * TB * Ph * 4)
    vmem_limit = int(min(max(vmem_bytes + (8 << 20), 32 << 20), 100 << 20))

    cost = pl.CostEstimate(
        flops=2 * Bp * (Dp * Ph + Lh * Ph * Ph),
        transcendentals=Bp * Ph * Lh,
        bytes_accessed=(itemsize * (Bp * Dp + Dp * Ph + Lh * Ph * Ph + (1 + Lh) * Ph)
                        + 4 * Bp * Ph),
    )

    kernel = functools.partial(estimator_kernel, n_rest=Lh, act_dtype=param_dtype)
    resident = pl.Buffered(1)   # grid-invariant params: single VMEM copy

    out = pl.pallas_call(
        kernel,
        out_shape=jax.ShapeDtypeStruct((Bp, Ph), jnp.float32),
        grid=grid,
        in_specs=[
            pl.BlockSpec((TB, Dp), lambda i: (i, 0)),                          # batch tile
            pl.BlockSpec((Dp, Ph), lambda i: (0, 0), pipeline_mode=resident),  # W0
            pl.BlockSpec((1, Ph), lambda i: (0, 0), pipeline_mode=resident),   # b0
            pl.BlockSpec((Lh, Ph, Ph), lambda i: (0, 0, 0), pipeline_mode=resident),  # Wh
            pl.BlockSpec((Lh, 1, Ph), lambda i: (0, 0, 0), pipeline_mode=resident),   # bh
        ],
        out_specs=pl.BlockSpec((TB, Ph), lambda i: (i, 0)),                    # lane-dense out
        compiler_params=pltpu.CompilerParams(
            dimension_semantics=("parallel",),
            vmem_limit_bytes=vmem_limit),
        cost_estimate=cost,
    )(xp, W0, B0, Wh, Bh)

    return out[:B, :num_actions]


def _ref_forward(x, bn_params, linears):
    """Pure-JAX f32 reference with identical semantics."""
    gamma, beta, mean, var, eps = bn_params
    h = x.reshape(x.shape[0], -1).astype(jnp.float32)
    h = (h - mean) / jnp.sqrt(var + eps) * gamma + beta
    n = len(linears)
    for i, (w, b) in enumerate(linears):
        h = h @ w + b
        if i < n - 1:
            h = jnp.tanh(h)
    return h


if __name__ == "__main__":
    # Module config (small, consistent with the torch module).
    num_actions = 2
    state_shape = [4, 16]            # prod = 64 input features
    mlp_layers = [32, 32]
    batch = 8

    d0 = int(np.prod(state_shape))
    layer_dims = [d0] + mlp_layers

    key = jax.random.PRNGKey(0)
    keys = jax.random.split(key, 16)
    ki = iter(keys)

    # Deterministic BatchNorm1d params (eval-mode running stats).
    gamma = 1.0 + 0.1 * jax.random.normal(next(ki), (d0,), jnp.float32)
    beta = 0.1 * jax.random.normal(next(ki), (d0,), jnp.float32)
    running_mean = 0.1 * jax.random.normal(next(ki), (d0,), jnp.float32)
    running_var = jnp.abs(1.0 + 0.1 * jax.random.normal(next(ki), (d0,), jnp.float32))
    bn_params = (gamma, beta, running_mean, running_var, 1e-5)

    # Deterministic Linear params (PyTorch-style U(-1/sqrt(fan_in), +1/sqrt(fan_in))).
    dims = layer_dims + [num_actions]
    linears = []
    for i in range(len(dims) - 1):
        fan_in, fan_out = dims[i], dims[i + 1]
        bound = 1.0 / np.sqrt(fan_in)
        w = jax.random.uniform(next(ki), (fan_in, fan_out), jnp.float32, -bound, bound)
        b = jax.random.uniform(next(ki), (fan_out,), jnp.float32, -bound, bound)
        linears.append((w, b))

    # Example input: (batch, *state_shape), matching torch forward's `s`.
    x = jax.random.normal(next(ki), (batch, *state_shape), jnp.float32)
    ref = _ref_forward(x, bn_params, linears)

    # --- f32 path: tight numerical check against the reference. ---
    packed_f32, meta_f32 = pack_estimator_params(bn_params, linears,
                                                 param_dtype=jnp.float32)
    out_f32 = jax.block_until_ready(estimator_forward(x, packed_f32, meta_f32))
    np.testing.assert_allclose(np.asarray(out_f32), np.asarray(ref),
                               rtol=1e-4, atol=1e-5)
    assert out_f32.shape == (batch, num_actions)

    # --- bf16 fast path (default): loose tolerance check. ---
    packed_bf16, meta_bf16 = pack_estimator_params(bn_params, linears)
    out_bf16 = jax.block_until_ready(estimator_forward(x, packed_bf16, meta_bf16))
    np.testing.assert_allclose(np.asarray(out_bf16), np.asarray(ref),
                               rtol=1e-1, atol=6e-2)
    assert out_bf16.shape == (batch, num_actions)

    print("KERNEL_OK")
</pallas_src>

<mosaic_0001>
module attributes {stable_mosaic.version = 11 : i64} {
  func.func @estimator_kernel(%arg0: i32, %arg1: memref<8x128xf32, #tpu.memory_space<vmem>>, %arg2: memref<128x128xf32, #tpu.memory_space<vmem>>, %arg3: memref<1x128xf32, #tpu.memory_space<vmem>>, %arg4: memref<2x128x128xf32, #tpu.memory_space<vmem>>, %arg5: memref<2x1x128xf32, #tpu.memory_space<vmem>>, %arg6: memref<8x128xf32, #tpu.memory_space<vmem>>) attributes {dimension_semantics = [#tpu.dimension_semantics<parallel>], iteration_bounds = array<i64: 1>, scalar_prefetch = 0 : i64, scratch_operands = 0 : i64, tpu.core_type = #tpu.core_type<tc>, window_params = [{transform_indices = @transform_0, window_bounds = array<i64: 8, 128>}, {pipeline_mode = #tpu.pipeline_mode<synchronous>, transform_indices = @transform_1, window_bounds = array<i64: 128, 128>}, {pipeline_mode = #tpu.pipeline_mode<synchronous>, transform_indices = @transform_2, window_bounds = array<i64: 1, 128>}, {pipeline_mode = #tpu.pipeline_mode<synchronous>, transform_indices = @transform_3, window_bounds = array<i64: 2, 128, 128>}, {pipeline_mode = #tpu.pipeline_mode<synchronous>, transform_indices = @transform_4, window_bounds = array<i64: 2, 1, 128>}, {transform_indices = @transform_5, window_bounds = array<i64: 8, 128>}]} {
    %c0 = arith.constant 0 : index
    %c0_0 = arith.constant 0 : index
    %0 = vector.load %arg1[%c0, %c0_0] : memref<8x128xf32, #tpu.memory_space<vmem>>, vector<8x128xf32>
    %c0_1 = arith.constant 0 : index
    %c0_2 = arith.constant 0 : index
    %1 = vector.load %arg2[%c0_1, %c0_2] : memref<128x128xf32, #tpu.memory_space<vmem>>, vector<128x128xf32>
    %cst = arith.constant dense<0.000000e+00> : vector<8x128xf32>
    %2 = tpu.matmul %0, %1, %cst {dimension_numbers = #tpu.dot_dimension_numbers<[1], [0], [0], [1], [0, 0, 1, 1], [], []>} : vector<8x128xf32>, vector<128x128xf32>, vector<8x128xf32> -> vector<8x128xf32>
    %c0_3 = arith.constant 0 : index
    %c0_4 = arith.constant 0 : index
    %3 = vector.load %arg3[%c0_3, %c0_4] : memref<1x128xf32, #tpu.memory_space<vmem>>, vector<1x128xf32>
    %4 = vector.broadcast %3 : vector<1x128xf32> to vector<8x128xf32>
    %5 = arith.addf %2, %4 : vector<8x128xf32>
    %6 = math.tanh %5 : vector<8x128xf32>
    %c0_5 = arith.constant 0 : index
    %c0_6 = arith.constant 0 : index
    %c0_7 = arith.constant 0 : index
    %7 = vector.load %arg4[%c0_5, %c0_6, %c0_7] : memref<2x128x128xf32, #tpu.memory_space<vmem>>, vector<1x128x128xf32>
    %8 = vector.shape_cast %7 : vector<1x128x128xf32> to vector<128x128xf32>
    %cst_8 = arith.constant dense<0.000000e+00> : vector<8x128xf32>
    %9 = tpu.matmul %6, %8, %cst_8 {dimension_numbers = #tpu.dot_dimension_numbers<[1], [0], [0], [1], [0, 0, 1, 1], [], []>} : vector<8x128xf32>, vector<128x128xf32>, vector<8x128xf32> -> vector<8x128xf32>
    %c0_9 = arith.constant 0 : index
    %c0_10 = arith.constant 0 : index
    %c0_11 = arith.constant 0 : index
    %10 = vector.load %arg5[%c0_9, %c0_10, %c0_11] : memref<2x1x128xf32, #tpu.memory_space<vmem>>, vector<1x1x128xf32>
    %11 = vector.shape_cast %10 : vector<1x1x128xf32> to vector<1x128xf32>
    %12 = vector.broadcast %11 : vector<1x128xf32> to vector<8x128xf32>
    %13 = arith.addf %9, %12 : vector<8x128xf32>
    %14 = math.tanh %13 : vector<8x128xf32>
    %c1 = arith.constant 1 : index
    %c0_12 = arith.constant 0 : index
    %c0_13 = arith.constant 0 : index
    %15 = vector.load %arg4[%c1, %c0_12, %c0_13] : memref<2x128x128xf32, #tpu.memory_space<vmem>>, vector<1x128x128xf32>
    %16 = vector.shape_cast %15 : vector<1x128x128xf32> to vector<128x128xf32>
    %cst_14 = arith.constant dense<0.000000e+00> : vector<8x128xf32>
    %17 = tpu.matmul %14, %16, %cst_14 {dimension_numbers = #tpu.dot_dimension_numbers<[1], [0], [0], [1], [0, 0, 1, 1], [], []>} : vector<8x128xf32>, vector<128x128xf32>, vector<8x128xf32> -> vector<8x128xf32>
    %c1_15 = arith.constant 1 : index
    %c0_16 = arith.constant 0 : index
    %c0_17 = arith.constant 0 : index
    %18 = vector.load %arg5[%c1_15, %c0_16, %c0_17] : memref<2x1x128xf32, #tpu.memory_space<vmem>>, vector<1x1x128xf32>
    %19 = vector.shape_cast %18 : vector<1x1x128xf32> to vector<1x128xf32>
    %20 = vector.broadcast %19 : vector<1x128xf32> to vector<8x128xf32>
    %21 = arith.addf %17, %20 : vector<8x128xf32>
    %c0_18 = arith.constant 0 : index
    %c0_19 = arith.constant 0 : index
    %22 = vector.load %arg6[%c0_18, %c0_19] : memref<8x128xf32, #tpu.memory_space<vmem>>, vector<8x128xf32>
    tpu.vector_store %arg6[%c0_18, %c0_19], %21 {strides = array<i32>} : memref<8x128xf32, #tpu.memory_space<vmem>>, vector<8x128xf32>,
    return
  }
  func.func @transform_0(%arg0: i32) -> (i32, i32) {
    %c0_i32 = arith.constant 0 : i32
    %c0_i32_0 = arith.constant 0 : i32
    return %arg0, %c0_i32 : i32, i32
  }
  func.func @transform_1(%arg0: i32) -> (i32, i32) {
    %c0_i32 = arith.constant 0 : i32
    %c0_i32_0 = arith.constant 0 : i32
    %c0_i32_1 = arith.constant 0 : i32
    return %c0_i32, %c0_i32_0 : i32, i32
  }
  func.func @transform_2(%arg0: i32) -> (i32, i32) {
    %c0_i32 = arith.constant 0 : i32
    %c0_i32_0 = arith.constant 0 : i32
    %c0_i32_1 = arith.constant 0 : i32
    return %c0_i32, %c0_i32_0 : i32, i32
  }
  func.func @transform_3(%arg0: i32) -> (i32, i32, i32) {
    %c0_i32 = arith.constant 0 : i32
    %c0_i32_0 = arith.constant 0 : i32
    %c0_i32_1 = arith.constant 0 : i32
    %c0_i32_2 = arith.constant 0 : i32
    return %c0_i32, %c0_i32_0, %c0_i32_1 : i32, i32, i32
  }
  func.func @transform_4(%arg0: i32) -> (i32, i32, i32) {
    %c0_i32 = arith.constant 0 : i32
    %c0_i32_0 = arith.constant 0 : i32
    %c0_i32_1 = arith.constant 0 : i32
    %c0_i32_2 = arith.constant 0 : i32
    return %c0_i32, %c0_i32_0, %c0_i32_1 : i32, i32, i32
  }
  func.func @transform_5(%arg0: i32) -> (i32, i32) {
    %c0_i32 = arith.constant 0 : i32
    %c0_i32_0 = arith.constant 0 : i32
    return %arg0, %c0_i32 : i32, i32
  }
}

</mosaic_0001>

<llo_original>
// kernel: tpu_custom_call.1
$region0: #{tpu_custom_call.1}
  #allocation0 [shape = 'u32[]', space=smem, size = 0x4, offset = 0x4, fixed_abs, tag = 'smem constant byte address 0x4 - core index']
  #allocation1 [shape = 'u32[144,128]{1,0:T(1,128)}', space=vmem, size = 0x12000, scoped, tag = 'internal scratch']
  %s0 = inlined_call_operand.hbm [shape: f32[8,128], index: 0, kind: input, shape index: {}]
  %s1 = inlined_call_operand.hbm [shape: f32[128,128], index: 1, kind: input, shape index: {}]
  %s2 = inlined_call_operand.vmem [shape: f32[1,128], index: 2, kind: input, shape index: {}]
  %s3 = inlined_call_operand.hbm [shape: f32[2,128,128], index: 3, kind: input, shape index: {}]
  %s4 = inlined_call_operand.vmem [shape: f32[2,1,128], index: 4, kind: input, shape index: {}]
  %s5 = inlined_call_operand.hbm [shape: f32[8,128], index: 5, kind: output, shape index: {}]
  %s6 = sld [smem:[#allocation0]]
  $region42: #{tpu_custom_call.1} parent=0
    _
  %s8 = ssub.s32 1, %s6
  %s9 = scalar_select 0, %s8, %s6
  $region1: #{tpu_custom_call.1} parent=0
    #allocation2 [shape = 'u8[4096]{0}', space=vmem, size = 0x1000, scoped, tag = 'input window, operand 0, single buffered']
    #allocation3 [shape = 's32[1]{0}', space=sflag, size = 0x4, scoped, tag = 'scoped memory for tpu_custom_call.1']
    #allocation4 [shape = 's32[1]{0}', space=sflag, size = 0x4, scoped, tag = 'scoped memory for tpu_custom_call.1']
    #allocation5 [shape = 'u8[65536]{0}', space=vmem, size = 0x10000, scoped, tag = 'input window, operand 1, single buffered']
    #allocation6 [shape = 's32[1]{0}', space=sflag, size = 0x4, scoped, tag = 'scoped memory for tpu_custom_call.1']
    #allocation7 [shape = 'u8[131072]{0}', space=vmem, size = 0x20000, scoped, tag = 'input window, operand 3, single buffered']
    #allocation8 [shape = 'u8[4096]{0}', space=vmem, size = 0x1000, scoped, tag = 'output window, operand 0, single buffered']
    %10 = vsyncpa [#allocation3], 0
    %11 = vsyncpa [#allocation6], 0
    %12 = vsyncpa [#allocation4], 0
    // Predicated region
    $region2: #{tpu_custom_call.1} parent=1 // pred_check
      _
    $region3: #{tpu_custom_call.1} parent=1 // pred_check_branch
      %14 = sbr.rel (0) target = $region5
    $region4: #{tpu_custom_call.1} parent=1 // pred_region
      %s16 = ssub.s32 128, 128
      %17 = vsyncadd [#allocation3], %s16
      %s19 = sshll.u32 [#allocation2], 4
      %s20 = int_to_ptr.vmem [resolvable:$true] %s19
      %22 = dma.hbm_to_vmem [thread:$0]  %s0, 128, %s20, [#allocation3]
    $region5: #{tpu_custom_call.1} parent=1 // pred_fallthru
      _
    // Predicated region
    $region6: #{tpu_custom_call.1} parent=1 // pred_check
      _
    $region7: #{tpu_custom_call.1} parent=1 // pred_check_branch
      %24 = sbr.rel (0) target = $region9
    $region8: #{tpu_custom_call.1} parent=1 // pred_region
      %s26 = ssub.s32 2048, 2048
      %27 = vsyncadd [#allocation6], %s26
      %s28 = sshll.u32 [#allocation5], 4
      %s29 = int_to_ptr.vmem [resolvable:$true] %s28
      %34 = dma.hbm_to_vmem [thread:$0]  %s1, 2048, %s29, [#allocation6], 128, 128, 8
    $region9: #{tpu_custom_call.1} parent=1 // pred_fallthru
      _
    // Predicated region
    $region10: #{tpu_custom_call.1} parent=1 // pred_check
      _
    $region11: #{tpu_custom_call.1} parent=1 // pred_check_branch
      %36 = sbr.rel (0) target = $region13
    $region12: #{tpu_custom_call.1} parent=1 // pred_region
      _
    $region13: #{tpu_custom_call.1} parent=1 // pred_fallthru
      _
    // Predicated region
    $region14: #{tpu_custom_call.1} parent=1 // pred_check
      _
    $region15: #{tpu_custom_call.1} parent=1 // pred_check_branch
      %38 = sbr.rel (0) target = $region17
    $region16: #{tpu_custom_call.1} parent=1 // pred_region
      %s40 = ssub.s32 4096, 4096
      %41 = vsyncadd [#allocation6], %s40
      %s42 = sshll.u32 [#allocation7], 4
      %s43 = int_to_ptr.vmem [resolvable:$true] %s42
      %48 = dma.hbm_to_vmem [thread:$0]  %s3, 4096, %s43, [#allocation6], 128, 128, 8
    $region17: #{tpu_custom_call.1} parent=1 // pred_fallthru
      _
    // Predicated region
    $region18: #{tpu_custom_call.1} parent=1 // pred_check
      _
    $region19: #{tpu_custom_call.1} parent=1 // pred_check_branch
      %50 = sbr.rel (0) target = $region21
    $region20: #{tpu_custom_call.1} parent=1 // pred_region
      _
    $region21: #{tpu_custom_call.1} parent=1 // pred_fallthru
      _
    // Predicated region
    $region22: #{tpu_custom_call.1} parent=1 // pred_check
      _
    $region23: #{tpu_custom_call.1} parent=1 // pred_check_branch
      %52 = sbr.rel (0) target = $region25
    $region24: #{tpu_custom_call.1} parent=1 // pred_region
      %53 = dma.done [#allocation3], 128
    $region25: #{tpu_custom_call.1} parent=1 // pred_fallthru
      _
    // Predicated region
    $region26: #{tpu_custom_call.1} parent=1 // pred_check
      _
    $region27: #{tpu_custom_call.1} parent=1 // pred_check_branch
      %55 = sbr.rel (0) target = $region29
    $region28: #{tpu_custom_call.1} parent=1 // pred_region
      %56 = dma.done [#allocation6], 2048
    $region29: #{tpu_custom_call.1} parent=1 // pred_fallthru
      _
    // Predicated region
    $region30: #{tpu_custom_call.1} parent=1 // pred_check
      _
    $region31: #{tpu_custom_call.1} parent=1 // pred_check_branch
      %58 = sbr.rel (0) target = $region33
    $region32: #{tpu_custom_call.1} parent=1 // pred_region
      %59 = dma.done [#allocation6], 4096
    $region33: #{tpu_custom_call.1} parent=1 // pred_fallthru
      _
    %v60 = vld [vmem:[#allocation2] sm:$0xff]
    %v61 = vld [vmem:[#allocation5] sm:$0xff]
    %v62 = vld [vmem:[#allocation5 + $0x8] sm:$0xff]
    %v63 = vld [vmem:[#allocation5 + $0x10] sm:$0xff]
    %v64 = vld [vmem:[#allocation5 + $0x18] sm:$0xff]
    %v65 = vld [vmem:[#allocation5 + $0x20] sm:$0xff]
    %v66 = vld [vmem:[#allocation5 + $0x28] sm:$0xff]
    %v67 = vld [vmem:[#allocation5 + $0x30] sm:$0xff]
    %v68 = vld [vmem:[#allocation5 + $0x38] sm:$0xff]
    %v69 = vld [vmem:[#allocation5 + $0x40] sm:$0xff]
    %v70 = vld [vmem:[#allocation5 + $0x48] sm:$0xff]
    %v71 = vld [vmem:[#allocation5 + $0x50] sm:$0xff]
    %v72 = vld [vmem:[#allocation5 + $0x58] sm:$0xff]
    %v73 = vld [vmem:[#allocation5 + $0x60] sm:$0xff]
    %v74 = vld [vmem:[#allocation5 + $0x68] sm:$0xff]
    %v75 = vld [vmem:[#allocation5 + $0x70] sm:$0xff]
    %v76 = vld [vmem:[#allocation5 + $0x78] sm:$0xff]
    %v77 = vld [vmem:[%s2] sm:$0x1]
    %v79 = vlaneseq
    %v80 = vshrl.u32 %v79, 7
    %v81 = vsub.s32 0, %v80
    %v82 = vrot.slane %v77, %v81
    %84 = vmatprep.subr.mxu0 0.0
    %85 = vmatpush1.msra.mxu0 %v61
    %86 = vmatprep.subr.mxu0 0.0
    %87 = vmatpush1.msra.mxu0 %v62
    %88 = vmatprep.subr.mxu0 0.0
    %89 = vmatpush1.msra.mxu0 %v63
    %90 = vmatprep.subr.mxu0 0.0
    %91 = vmatpush1.msra.mxu0 %v64
    %92 = vmatprep.subr.mxu0 0.0
    %93 = vmatpush1.msra.mxu0 %v65
    %94 = vmatprep.subr.mxu0 0.0
    %95 = vmatpush1.msra.mxu0 %v66
    %96 = vmatprep.subr.mxu0 0.0
    %97 = vmatpush1.msra.mxu0 %v67
    %98 = vmatprep.subr.mxu0 0.0
    %99 = vmatpush1.msra.mxu0 %v68
    %100 = vmatprep.subr.mxu0 0.0
    %101 = vmatpush1.msra.mxu0 %v69
    %102 = vmatprep.subr.mxu0 0.0
    %103 = vmatpush1.msra.mxu0 %v70
    %104 = vmatprep.subr.mxu0 0.0
    %105 = vmatpush1.msra.mxu0 %v71
    %106 = vmatprep.subr.mxu0 0.0
    %107 = vmatpush1.msra.mxu0 %v72
    %108 = vmatprep.subr.mxu0 0.0
    %109 = vmatpush1.msra.mxu0 %v73
    %110 = vmatprep.subr.mxu0 0.0
    %111 = vmatpush1.msra.mxu0 %v74
    %112 = vmatprep.subr.mxu0 0.0
    %113 = vmatpush1.msra.mxu0 %v75
    %114 = vmatprep.subr.mxu0 0.0
    %115 = vmatpush1.msra.mxu0 %v76
    %116 = vmatprep.subr.mxu0 0.0
    %117 = vmatpush1.msra.mxu0 0.0
    %118 = vmatprep.subr.mxu0 0.0
    %119 = vmatpush1.msra.mxu0 0.0
    %120 = vmatprep.subr.mxu0 0.0
    %121 = vmatpush1.msra.mxu0 0.0
    %122 = vmatprep.subr.mxu0 0.0
    %123 = vmatpush1.msra.mxu0 0.0
    %124 = vmatprep.subr.mxu0 0.0
    %125 = vmatpush1.msra.mxu0 0.0
    %126 = vmatprep.subr.mxu0 0.0
    %127 = vmatpush1.msra.mxu0 0.0
    %128 = vmatprep.subr.mxu0 0.0
    %129 = vmatpush1.msra.mxu0 0.0
    %130 = vmatprep.subr.mxu0 0.0
    %131 = vmatpush1.msra.mxu0 0.0
    %132 = vmatprep.subr.mxu0 0.0
    %133 = vmatpush1.msra.mxu0 0.0
    %134 = vmatprep.subr.mxu0 0.0
    %135 = vmatpush1.msra.mxu0 0.0
    %136 = vmatprep.subr.mxu0 0.0
    %137 = vmatpush1.msra.mxu0 0.0
    %138 = vmatprep.subr.mxu0 0.0
    %139 = vmatpush1.msra.mxu0 0.0
    %140 = vmatprep.subr.mxu0 0.0
    %141 = vmatpush1.msra.mxu0 0.0
    %142 = vmatprep.subr.mxu0 0.0
    %143 = vmatpush1.msra.mxu0 0.0
    %144 = vmatprep.subr.mxu0 0.0
    %145 = vmatpush1.msra.mxu0 0.0
    %146 = vmatprep.subr.mxu0 0.0
    %147 = vmatpush1.msra.mxu0 0.0
    %148 = vmatprep.mubr.f32.mxu0 0.0
    %149 = vmatmul.mubr.f32.gmra.mrb[0].mxu0 %v60
    %v150 = vpop.f32.mrb[0].mxu0
    %v151 = vadd.f32 %v82, %v150
    %v152 = vpop.f32.mrb[0].mxu0
    %153 = vdwg.mxu0
    %v154 = vtanh.pop %v151
    %v155 = vld [vmem:[#allocation7] sm:$0xff]
    %v156 = vld [vmem:[#allocation7 + $0x8] sm:$0xff]
    %v157 = vld [vmem:[#allocation7 + $0x10] sm:$0xff]
    %v158 = vld [vmem:[#allocation7 + $0x18] sm:$0xff]
    %v159 = vld [vmem:[#allocation7 + $0x20] sm:$0xff]
    %v160 = vld [vmem:[#allocation7 + $0x28] sm:$0xff]
    %v161 = vld [vmem:[#allocation7 + $0x30] sm:$0xff]
    %v162 = vld [vmem:[#allocation7 + $0x38] sm:$0xff]
    %v163 = vld [vmem:[#allocation7 + $0x40] sm:$0xff]
    %v164 = vld [vmem:[#allocation7 + $0x48] sm:$0xff]
    %v165 = vld [vmem:[#allocation7 + $0x50] sm:$0xff]
    %v166 = vld [vmem:[#allocation7 + $0x58] sm:$0xff]
    %v167 = vld [vmem:[#allocation7 + $0x60] sm:$0xff]
    %v168 = vld [vmem:[#allocation7 + $0x68] sm:$0xff]
    %v169 = vld [vmem:[#allocation7 + $0x70] sm:$0xff]
    %v170 = vld [vmem:[#allocation7 + $0x78] sm:$0xff]
    %v171 = vld [vmem:[%s4] sm:$0x1]
    %v173 = vlaneseq
    %v174 = vshrl.u32 %v173, 7
    %v175 = vsub.s32 0, %v174
    %v176 = vrot.slane %v171, %v175
    %178 = vmatprep.subr.mxu0 0.0
    %179 = vmatpush1.msra.mxu0 %v155
    %180 = vmatprep.subr.mxu0 0.0
    %181 = vmatpush1.msra.mxu0 %v156
    %182 = vmatprep.subr.mxu0 0.0
    %183 = vmatpush1.msra.mxu0 %v157
    %184 = vmatprep.subr.mxu0 0.0
    %185 = vmatpush1.msra.mxu0 %v158
    %186 = vmatprep.subr.mxu0 0.0
    %187 = vmatpush1.msra.mxu0 %v159
    %188 = vmatprep.subr.mxu0 0.0
    %189 = vmatpush1.msra.mxu0 %v160
    %190 = vmatprep.subr.mxu0 0.0
    %191 = vmatpush1.msra.mxu0 %v161
    %192 = vmatprep.subr.mxu0 0.0
    %193 = vmatpush1.msra.mxu0 %v162
    %194 = vmatprep.subr.mxu0 0.0
    %195 = vmatpush1.msra.mxu0 %v163
    %196 = vmatprep.subr.mxu0 0.0
    %197 = vmatpush1.msra.mxu0 %v164
    %198 = vmatprep.subr.mxu0 0.0
    %199 = vmatpush1.msra.mxu0 %v165
    %200 = vmatprep.subr.mxu0 0.0
    %201 = vmatpush1.msra.mxu0 %v166
    %202 = vmatprep.subr.mxu0 0.0
    %203 = vmatpush1.msra.mxu0 %v167
    %204 = vmatprep.subr.mxu0 0.0
    %205 = vmatpush1.msra.mxu0 %v168
    %206 = vmatprep.subr.mxu0 0.0
    %207 = vmatpush1.msra.mxu0 %v169
    %208 = vmatprep.subr.mxu0 0.0
    %209 = vmatpush1.msra.mxu0 %v170
    %210 = vmatprep.subr.mxu0 0.0
    %211 = vmatpush1.msra.mxu0 0.0
    %212 = vmatprep.subr.mxu0 0.0
    %213 = vmatpush1.msra.mxu0 0.0
    %214 = vmatprep.subr.mxu0 0.0
    %215 = vmatpush1.msra.mxu0 0.0
    %216 = vmatprep.subr.mxu0 0.0
    %217 = vmatpush1.msra.mxu0 0.0
    %218 = vmatprep.subr.mxu0 0.0
    %219 = vmatpush1.msra.mxu0 0.0
    %220 = vmatprep.subr.mxu0 0.0
    %221 = vmatpush1.msra.mxu0 0.0
    %222 = vmatprep.subr.mxu0 0.0
    %223 = vmatpush1.msra.mxu0 0.0
    %224 = vmatprep.subr.mxu0 0.0
    %225 = vmatpush1.msra.mxu0 0.0
    %226 = vmatprep.subr.mxu0 0.0
    %227 = vmatpush1.msra.mxu0 0.0
    %228 = vmatprep.subr.mxu0 0.0
    %229 = vmatpush1.msra.mxu0 0.0
    %230 = vmatprep.subr.mxu0 0.0
    %231 = vmatpush1.msra.mxu0 0.0
    %232 = vmatprep.subr.mxu0 0.0
    %233 = vmatpush1.msra.mxu0 0.0
    %234 = vmatprep.subr.mxu0 0.0
    %235 = vmatpush1.msra.mxu0 0.0
    %236 = vmatprep.subr.mxu0 0.0
    %237 = vmatpush1.msra.mxu0 0.0
    %238 = vmatprep.subr.mxu0 0.0
    %239 = vmatpush1.msra.mxu0 0.0
    %240 = vmatprep.subr.mxu0 0.0
    %241 = vmatpush1.msra.mxu0 0.0
    %242 = vmatprep.mubr.f32.mxu0 0.0
    %243 = vmatmul.mubr.f32.gmra.mrb[0].mxu0 %v154
    %v244 = vpop.f32.mrb[0].mxu0
    %v245 = vadd.f32 %v176, %v244
    %v246 = vpop.f32.mrb[0].mxu0
    %247 = vdwg.mxu0
    %v248 = vtanh.pop %v245
    %s249 = scalar_lea.vmem [#allocation7], 128
    %v250 = vld [vmem:[%s249] sm:$0xff]
    %v251 = vld [vmem:[%s249 + $0x8] sm:$0xff]
    %v252 = vld [vmem:[%s249 + $0x10] sm:$0xff]
    %v253 = vld [vmem:[%s249 + $0x18] sm:$0xff]
    %v254 = vld [vmem:[%s249 + $0x20] sm:$0xff]
    %v255 = vld [vmem:[%s249 + $0x28] sm:$0xff]
    %v256 = vld [vmem:[%s249 + $0x30] sm:$0xff]
    %v257 = vld [vmem:[%s249 + $0x38] sm:$0xff]
    %v258 = vld [vmem:[%s249 + $0x40] sm:$0xff]
    %v259 = vld [vmem:[%s249 + $0x48] sm:$0xff]
    %v260 = vld [vmem:[%s249 + $0x50] sm:$0xff]
    %v261 = vld [vmem:[%s249 + $0x58] sm:$0xff]
    %v262 = vld [vmem:[%s249 + $0x60] sm:$0xff]
    %v263 = vld [vmem:[%s249 + $0x68] sm:$0xff]
    %v264 = vld [vmem:[%s249 + $0x70] sm:$0xff]
    %v265 = vld [vmem:[%s249 + $0x78] sm:$0xff]
    %s266 = scalar_lea.vmem %s4, 1
    %v267 = vld [vmem:[%s266] sm:$0x1]
    %v269 = vlaneseq
    %v270 = vshrl.u32 %v269, 7
    %v271 = vsub.s32 0, %v270
    %v272 = vrot.slane %v267, %v271
    %274 = vmatprep.subr.mxu0 0.0
    %275 = vmatpush1.msra.mxu0 %v250
    %276 = vmatprep.subr.mxu0 0.0
    %277 = vmatpush1.msra.mxu0 %v251
    %278 = vmatprep.subr.mxu0 0.0
    %279 = vmatpush1.msra.mxu0 %v252
    %280 = vmatprep.subr.mxu0 0.0
    %281 = vmatpush1.msra.mxu0 %v253
    %282 = vmatprep.subr.mxu0 0.0
    %283 = vmatpush1.msra.mxu0 %v254
    %284 = vmatprep.subr.mxu0 0.0
    %285 = vmatpush1.msra.mxu0 %v255
    %286 = vmatprep.subr.mxu0 0.0
    %287 = vmatpush1.msra.mxu0 %v256
    %288 = vmatprep.subr.mxu0 0.0
    %289 = vmatpush1.msra.mxu0 %v257
    %290 = vmatprep.subr.mxu0 0.0
    %291 = vmatpush1.msra.mxu0 %v258
    %292 = vmatprep.subr.mxu0 0.0
    %293 = vmatpush1.msra.mxu0 %v259
    %294 = vmatprep.subr.mxu0 0.0
    %295 = vmatpush1.msra.mxu0 %v260
    %296 = vmatprep.subr.mxu0 0.0
    %297 = vmatpush1.msra.mxu0 %v261
    %298 = vmatprep.subr.mxu0 0.0
    %299 = vmatpush1.msra.mxu0 %v262
    %300 = vmatprep.subr.mxu0 0.0
    %301 = vmatpush1.msra.mxu0 %v263
    %302 = vmatprep.subr.mxu0 0.0
    %303 = vmatpush1.msra.mxu0 %v264
    %304 = vmatprep.subr.mxu0 0.0
    %305 = vmatpush1.msra.mxu0 %v265
    %306 = vmatprep.subr.mxu0 0.0
    %307 = vmatpush1.msra.mxu0 0.0
    %308 = vmatprep.subr.mxu0 0.0
    %309 = vmatpush1.msra.mxu0 0.0
    %310 = vmatprep.subr.mxu0 0.0
    %311 = vmatpush1.msra.mxu0 0.0
    %312 = vmatprep.subr.mxu0 0.0
    %313 = vmatpush1.msra.mxu0 0.0
    %314 = vmatprep.subr.mxu0 0.0
    %315 = vmatpush1.msra.mxu0 0.0
    %316 = vmatprep.subr.mxu0 0.0
    %317 = vmatpush1.msra.mxu0 0.0
    %318 = vmatprep.subr.mxu0 0.0
    %319 = vmatpush1.msra.mxu0 0.0
    %320 = vmatprep.subr.mxu0 0.0
    %321 = vmatpush1.msra.mxu0 0.0
    %322 = vmatprep.subr.mxu0 0.0
    %323 = vmatpush1.msra.mxu0 0.0
    %324 = vmatprep.subr.mxu0 0.0
    %325 = vmatpush1.msra.mxu0 0.0
    %326 = vmatprep.subr.mxu0 0.0
    %327 = vmatpush1.msra.mxu0 0.0
    %328 = vmatprep.subr.mxu0 0.0
    %329 = vmatpush1.msra.mxu0 0.0
    %330 = vmatprep.subr.mxu0 0.0
    %331 = vmatpush1.msra.mxu0 0.0
    %332 = vmatprep.subr.mxu0 0.0
    %333 = vmatpush1.msra.mxu0 0.0
    %334 = vmatprep.subr.mxu0 0.0
    %335 = vmatpush1.msra.mxu0 0.0
    %336 = vmatprep.subr.mxu0 0.0
    %337 = vmatpush1.msra.mxu0 0.0
    %338 = vmatprep.mubr.f32.mxu0 0.0
    %339 = vmatmul.mubr.f32.gmra.mrb[0].mxu0 %v248
    %v340 = vpop.f32.mrb[0].mxu0
    %v341 = vadd.f32 %v272, %v340
    %v342 = vpop.f32.mrb[0].mxu0
    %343 = vdwg.mxu0
    %344 = vst [vmem:[#allocation8] sm:$0xff] %v341
    // Predicated region
    $region34: #{tpu_custom_call.1} parent=1 // pred_check
      _
    $region35: #{tpu_custom_call.1} parent=1 // pred_check_branch
      %346 = sbr.rel (0) target = $region37
    $region36: #{tpu_custom_call.1} parent=1 // pred_region
      %s348 = ssub.s32 128, 128
      %349 = vsyncadd [#allocation4], %s348
      %s351 = sshll.u32 [#allocation8], 4
      %s352 = int_to_ptr.vmem [resolvable:$true] %s351
      %354 = dma.vmem_to_hbm [thread:$0]  %s352, 128, %s5, [#allocation4]
    $region37: #{tpu_custom_call.1} parent=1 // pred_fallthru
      _
    // Predicated region
    $region38: #{tpu_custom_call.1} parent=1 // pred_check
      _
    $region39: #{tpu_custom_call.1} parent=1 // pred_check_branch
      %356 = sbr.rel (0) target = $region41
    $region40: #{tpu_custom_call.1} parent=1 // pred_region
      %357 = dma.done [#allocation4], 128
    $region41: #{tpu_custom_call.1} parent=1 // pred_fallthru
      _
    %358 = vsyncpa [#allocation3], 1
    %359 = vsyncpa [#allocation6], 1
    %360 = vsyncpa [#allocation4], 1

</llo_original>
